<compile_context>
chip_gen: v5e
topology: v5e:2x2
jax: 0.10.0
libtpu: 0.0.40
codegen_flags: <defaults>
</compile_context>

<pallas_src>
import math

import jax
import jax.numpy as jnp
from jax.experimental import pallas as pl
from jax.experimental.pallas import tpu as pltpu


def _linear_kernel(x_ref, w_ref, b_ref, o_ref):
    # x_ref: (TM, K') in the caller's native dtype; cast to the weight's (bf16)
    # dtype here, on VMEM-resident data, instead of in a separate XLA convert.
    x = x_ref[...]
    if x.dtype != w_ref.dtype:
        x = x.astype(w_ref.dtype)
    acc = jnp.dot(x, w_ref[...], preferred_element_type=jnp.float32)
    o_ref[...] = (acc + b_ref[...]).astype(o_ref.dtype)


def updownsample_forward(x, weight, bias, *, block_rows=4096,
                         compute_dtype=jnp.bfloat16, out_dtype=None):
    """x: (..., in_channels); weight: (out_channels, in_channels); bias: (out_channels,)."""
    out_channels, in_channels = weight.shape
    lead_shape = x.shape[:-1]
    m = math.prod(lead_shape) if lead_shape else 1
    out_dtype = x.dtype if out_dtype is None else out_dtype
    compute_dtype = weight.dtype if compute_dtype is None else compute_dtype

    # ---- Lane-density folding --------------------------------------------------
    # out_channels (e.g. 16) << 128 would make every store a masked vst.msk.
    # Fold `f` consecutive rows into one so the output last dim is f*N (multiple of
    # 128). This is a contiguous reshape of the (m, N) result; the weight becomes a
    # tiny block-diagonal (f*K, f*N) matrix that stays VMEM-resident.
    f = 128 // math.gcd(out_channels, 128)          # <= 8 for out_channels = 16
    pad_rows = (-m) % f                              # pad rows instead of f=1 fallback
    m_pad = m + pad_rows

    m_fold = m_pad // f
    k_fold = f * in_channels
    n_fold = f * out_channels

    # Stream x in its native dtype (no wrapper-side cast = no extra HBM pass).
    x_rows = x.reshape(m, in_channels)
    if pad_rows:
        x_rows = jnp.pad(x_rows, ((0, pad_rows), (0, 0)))
    x2d = x_rows.reshape(m_fold, k_fold)

    w_t = weight.T
    if f > 1:
        w_fold = jnp.kron(jnp.eye(f, dtype=w_t.dtype), w_t)          # block-diag (f*K, f*N)
        b_fold = jnp.tile(bias.astype(jnp.float32), f).reshape(1, n_fold)
    else:
        w_fold = w_t
        b_fold = bias.astype(jnp.float32).reshape(1, n_fold)
    w_fold = w_fold.astype(compute_dtype)            # tiny, one-time cast is free

    # ---- Tiling over the (folded) row dimension ---------------------------------
    block_rows = max(8, (block_rows // 8) * 8)
    tm = min(block_rows, m_fold)
    if m_fold <= block_rows and m_fold >= 16:
        # Force >= 2 grid steps so the "parallel" axis really splits across both
        # TensorCores on v7x (no effect on single-TC v5e/v6e).
        tm = ((-(-m_fold // 2)) + 7) // 8 * 8
    grid = (pl.cdiv(m_fold, tm),)

    x_itemsize = jnp.dtype(x.dtype).itemsize
    w_itemsize = jnp.dtype(compute_dtype).itemsize
    out_itemsize = jnp.dtype(out_dtype).itemsize

    cost = pl.CostEstimate(
        flops=2 * m_fold * k_fold * n_fold,           # padded matmul actually executed
        transcendentals=0,
        bytes_accessed=(m_fold * k_fold * x_itemsize
                        + k_fold * n_fold * w_itemsize
                        + n_fold * 4
                        + m_fold * n_fold * out_itemsize),
    )

    # Explicit scoped-VMEM budget: double-buffered input + output tiles + weight/bias.
    vmem_need = (2 * tm * k_fold * x_itemsize
                 + 2 * tm * n_fold * out_itemsize
                 + 2 * k_fold * n_fold * w_itemsize
                 + 2 * n_fold * 4)
    vmem_limit = int(min(max(2 * vmem_need, 8 << 20), 64 << 20))

    out2d = pl.pallas_call(
        _linear_kernel,
        out_shape=jax.ShapeDtypeStruct((m_fold, n_fold), out_dtype),
        grid=grid,
        in_specs=[
            pl.BlockSpec((tm, k_fold), lambda i: (i, 0)),       # streamed activation rows
            pl.BlockSpec((k_fold, n_fold), lambda i: (0, 0)),   # VMEM-resident weight
            pl.BlockSpec((1, n_fold), lambda i: (0, 0)),        # VMEM-resident bias
        ],
        out_specs=pl.BlockSpec((tm, n_fold), lambda i: (i, 0)),
        compiler_params=pltpu.CompilerParams(
            dimension_semantics=("parallel",),                  # megacore-shard rows on v7x
            vmem_limit_bytes=vmem_limit,
        ),
        cost_estimate=cost,
    )(x2d, w_fold, b_fold)

    out_rows = out2d.reshape(m_pad, out_channels)
    if pad_rows:
        out_rows = out_rows[:m]
    return out_rows.reshape(*lead_shape, out_channels)


if __name__ == "__main__":
    key = jax.random.PRNGKey(0)
    k_x, k_w, k_b = jax.random.split(key, 3)

    batch, seq = 2, 8
    in_channels, out_channels = 32, 16

    x = jax.random.normal(k_x, (batch, seq, in_channels), dtype=jnp.float32)

    # Deterministic parameter init (mimics nn.Linear's uniform(-1/sqrt(in), 1/sqrt(in)))
    bound = 1.0 / (in_channels ** 0.5)
    weight = jax.random.uniform(
        k_w, (out_channels, in_channels), minval=-bound, maxval=bound, dtype=jnp.float32
    )
    bias = jax.random.uniform(
        k_b, (out_channels,), minval=-bound, maxval=bound, dtype=jnp.float32
    )

    out = updownsample_forward(x, weight, bias)
    out = jax.block_until_ready(out)
    assert out.shape == (batch, seq, out_channels)

    # Reference with the same bf16-cast / f32-accumulate arithmetic as the kernel.
    ref_bf16 = (jnp.dot(x.astype(jnp.bfloat16).reshape(-1, in_channels),
                        weight.T.astype(jnp.bfloat16),
                        preferred_element_type=jnp.float32)
                + bias).reshape(batch, seq, out_channels).astype(x.dtype)
    assert jnp.allclose(out, ref_bf16, atol=1e-4, rtol=1e-4)

    # Full-precision nn.Linear reference (loose tolerance covers the bf16 cast).
    ref_f32 = x @ weight.T + bias
    assert jnp.allclose(out, ref_f32, atol=3e-2, rtol=3e-2)

    # Exercise the row-padding path (m not a multiple of f=8) for coverage.
    x_odd = jax.random.normal(k_x, (3, 5, in_channels), dtype=jnp.float32)
    out_odd = jax.block_until_ready(updownsample_forward(x_odd, weight, bias))
    ref_odd = x_odd @ weight.T + bias
    assert out_odd.shape == (3, 5, out_channels)
    assert jnp.allclose(out_odd, ref_odd, atol=3e-2, rtol=3e-2)

    print("KERNEL_OK")
</pallas_src>

<mosaic_0001>
module attributes {stable_mosaic.version = 11 : i64} {
  func.func @_linear_kernel(%arg0: i32, %arg1: memref<2x256xf32, #tpu.memory_space<vmem>>, %arg2: memref<256x128xbf16, #tpu.memory_space<vmem>>, %arg3: memref<1x128xf32, #tpu.memory_space<vmem>>, %arg4: memref<2x128xf32, #tpu.memory_space<vmem>>) attributes {dimension_semantics = [#tpu.dimension_semantics<parallel>], iteration_bounds = array<i64: 1>, scalar_prefetch = 0 : i64, scratch_operands = 0 : i64, tpu.core_type = #tpu.core_type<tc>, window_params = [{transform_indices = @transform_0, window_bounds = array<i64: 2, 256>}, {pipeline_mode = #tpu.pipeline_mode<synchronous>, transform_indices = @transform_1, window_bounds = array<i64: 256, 128>}, {pipeline_mode = #tpu.pipeline_mode<synchronous>, transform_indices = @transform_2, window_bounds = array<i64: 1, 128>}, {transform_indices = @transform_3, window_bounds = array<i64: 2, 128>}]} {
    %c0 = arith.constant 0 : index
    %c0_0 = arith.constant 0 : index
    %0 = vector.load %arg1[%c0, %c0_0] : memref<2x256xf32, #tpu.memory_space<vmem>>, vector<2x256xf32>
    %1 = arith.truncf %0 : vector<2x256xf32> to vector<2x256xbf16>
    %c0_1 = arith.constant 0 : index
    %c0_2 = arith.constant 0 : index
    %2 = vector.load %arg2[%c0_1, %c0_2] : memref<256x128xbf16, #tpu.memory_space<vmem>>, vector<256x128xbf16>
    %cst = arith.constant dense<0.000000e+00> : vector<2x128xf32>
    %3 = tpu.matmul %1, %2, %cst {dimension_numbers = #tpu.dot_dimension_numbers<[1], [0], [0], [1], [0, 0, 1, 1], [], []>} : vector<2x256xbf16>, vector<256x128xbf16>, vector<2x128xf32> -> vector<2x128xf32>
    %c0_3 = arith.constant 0 : index
    %c0_4 = arith.constant 0 : index
    %4 = vector.load %arg3[%c0_3, %c0_4] : memref<1x128xf32, #tpu.memory_space<vmem>>, vector<1x128xf32>
    %5 = vector.broadcast %4 : vector<1x128xf32> to vector<2x128xf32>
    %6 = arith.addf %3, %5 : vector<2x128xf32>
    %c0_5 = arith.constant 0 : index
    %c0_6 = arith.constant 0 : index
    %7 = vector.load %arg4[%c0_5, %c0_6] : memref<2x128xf32, #tpu.memory_space<vmem>>, vector<2x128xf32>
    tpu.vector_store %arg4[%c0_5, %c0_6], %6 {strides = array<i32>} : memref<2x128xf32, #tpu.memory_space<vmem>>, vector<2x128xf32>,
    return
  }
  func.func @transform_0(%arg0: i32) -> (i32, i32) {
    %c0_i32 = arith.constant 0 : i32
    %c0_i32_0 = arith.constant 0 : i32
    return %arg0, %c0_i32 : i32, i32
  }
  func.func @transform_1(%arg0: i32) -> (i32, i32) {
    %c0_i32 = arith.constant 0 : i32
    %c0_i32_0 = arith.constant 0 : i32
    %c0_i32_1 = arith.constant 0 : i32
    return %c0_i32, %c0_i32_0 : i32, i32
  }
  func.func @transform_2(%arg0: i32) -> (i32, i32) {
    %c0_i32 = arith.constant 0 : i32
    %c0_i32_0 = arith.constant 0 : i32
    %c0_i32_1 = arith.constant 0 : i32
    return %c0_i32, %c0_i32_0 : i32, i32
  }
  func.func @transform_3(%arg0: i32) -> (i32, i32) {
    %c0_i32 = arith.constant 0 : i32
    %c0_i32_0 = arith.constant 0 : i32
    return %arg0, %c0_i32 : i32, i32
  }
}

</mosaic_0001>

<llo_original>
// kernel: tpu_custom_call.1
$region0: #{tpu_custom_call.1}
  #allocation0 [shape = 'u32[]', space=smem, size = 0x4, offset = 0x4, fixed_abs, tag = 'smem constant byte address 0x4 - core index']
  #allocation1 [shape = 'u32[72,128]{1,0:T(1,128)}', space=vmem, size = 0x9000, scoped, tag = 'internal scratch']
  %s0 = inlined_call_operand.hbm [shape: f32[2,256], index: 0, kind: input, shape index: {}]
  %s1 = inlined_call_operand.hbm [shape: bf16[256,128], index: 1, kind: input, shape index: {}]
  %s2 = inlined_call_operand.vmem [shape: f32[1,128], index: 2, kind: input, shape index: {}]
  %s3 = inlined_call_operand.hbm [shape: f32[2,128], index: 3, kind: output, shape index: {}]
  %s4 = sld [smem:[#allocation0]]
  $region30: #{tpu_custom_call.1} parent=0
    _
  %s6 = ssub.s32 1, %s4
  %s7 = scalar_select 0, %s6, %s4
  $region1: #{tpu_custom_call.1} parent=0
    #allocation2 [shape = 'u8[2048]{0}', space=vmem, size = 0x800, scoped, tag = 'input window, operand 0, single buffered']
    #allocation3 [shape = 's32[1]{0}', space=sflag, size = 0x4, scoped, tag = 'scoped memory for tpu_custom_call.1']
    #allocation4 [shape = 's32[1]{0}', space=sflag, size = 0x4, scoped, tag = 'scoped memory for tpu_custom_call.1']
    #allocation5 [shape = 'u8[65536]{0}', space=vmem, size = 0x10000, scoped, tag = 'input window, operand 1, single buffered']
    #allocation6 [shape = 's32[1]{0}', space=sflag, size = 0x4, scoped, tag = 'scoped memory for tpu_custom_call.1']
    #allocation7 [shape = 'u8[1024]{0}', space=vmem, size = 0x400, scoped, tag = 'output window, operand 0, single buffered']
    %8 = vsyncpa [#allocation3], 0
    %9 = vsyncpa [#allocation6], 0
    %10 = vsyncpa [#allocation4], 0
    // Predicated region
    $region2: #{tpu_custom_call.1} parent=1 // pred_check
      _
    $region3: #{tpu_custom_call.1} parent=1 // pred_check_branch
      %12 = sbr.rel (0) target = $region5
    $region4: #{tpu_custom_call.1} parent=1 // pred_region
      %14 = vsyncadd [#allocation3], 0
      %s16 = sshll.u32 %s0, 4
      %s17 = int_to_ptr.hbm [resolvable:$true] %s16
      %s18 = sshll.u32 [#allocation2], 4
      %s19 = int_to_ptr.vmem [resolvable:$true] %s18
      %21 = dma.hbm_to_vmem [thread:$0]  %s17, 64, %s19, [#allocation3]
    $region5: #{tpu_custom_call.1} parent=1 // pred_fallthru
      _
    // Predicated region
    $region6: #{tpu_custom_call.1} parent=1 // pred_check
      _
    $region7: #{tpu_custom_call.1} parent=1 // pred_check_branch
      %23 = sbr.rel (0) target = $region9
    $region8: #{tpu_custom_call.1} parent=1 // pred_region
      %25 = vsyncadd [#allocation6], 0
      %s26 = sshll.u32 %s1, 4
      %s27 = int_to_ptr.hbm [resolvable:$true] %s26
      %s28 = sshll.u32 [#allocation5], 4
      %s29 = int_to_ptr.vmem [resolvable:$true] %s28
      %34 = dma.hbm_to_vmem [thread:$0]  %s27, 2048, %s29, [#allocation6], 64, 64, 4
    $region9: #{tpu_custom_call.1} parent=1 // pred_fallthru
      _
    // Predicated region
    $region10: #{tpu_custom_call.1} parent=1 // pred_check
      _
    $region11: #{tpu_custom_call.1} parent=1 // pred_check_branch
      %36 = sbr.rel (0) target = $region13
    $region12: #{tpu_custom_call.1} parent=1 // pred_region
      _
    $region13: #{tpu_custom_call.1} parent=1 // pred_fallthru
      _
    // Predicated region
    $region14: #{tpu_custom_call.1} parent=1 // pred_check
      _
    $region15: #{tpu_custom_call.1} parent=1 // pred_check_branch
      %38 = sbr.rel (0) target = $region17
    $region16: #{tpu_custom_call.1} parent=1 // pred_region
      %40 = dma.done [#allocation3], 64
    $region17: #{tpu_custom_call.1} parent=1 // pred_fallthru
      _
    // Predicated region
    $region18: #{tpu_custom_call.1} parent=1 // pred_check
      _
    $region19: #{tpu_custom_call.1} parent=1 // pred_check_branch
      %42 = sbr.rel (0) target = $region21
    $region20: #{tpu_custom_call.1} parent=1 // pred_region
      %44 = dma.done [#allocation6], 2048
    $region21: #{tpu_custom_call.1} parent=1 // pred_fallthru
      _
    %v45 = vld [vmem:[#allocation2] sm:$0xf]
    %47 = vst [vmem:[#allocation1] ss:$4 sm:$0xff] %v45
    %v48 = vld.sshfl [vmem:[#allocation1] sm:$0xff pattern:$0x73625140]
    %v49 = vld.sshfl [vmem:[#allocation1 + $0x8] sm:$0xff pattern:$0x73625140]
    %v52 = vpack.c.bf16 %v48, %v48
    %v53 = vpack.c.bf16 %v49, %v49
    %v54 = vld [vmem:[#allocation5] sm:$0xf]
    %v55 = vld [vmem:[#allocation5 + $0x4] sm:$0xf]
    %v56 = vld [vmem:[#allocation5 + $0x8] sm:$0xf]
    %v57 = vld [vmem:[#allocation5 + $0xc] sm:$0xf]
    %v58 = vld [vmem:[#allocation5 + $0x10] sm:$0xf]
    %v59 = vld [vmem:[#allocation5 + $0x14] sm:$0xf]
    %v60 = vld [vmem:[#allocation5 + $0x18] sm:$0xf]
    %v61 = vld [vmem:[#allocation5 + $0x1c] sm:$0xf]
    %v62 = vld [vmem:[#allocation5 + $0x20] sm:$0xf]
    %v63 = vld [vmem:[#allocation5 + $0x24] sm:$0xf]
    %v64 = vld [vmem:[#allocation5 + $0x28] sm:$0xf]
    %v65 = vld [vmem:[#allocation5 + $0x2c] sm:$0xf]
    %v66 = vld [vmem:[#allocation5 + $0x30] sm:$0xf]
    %v67 = vld [vmem:[#allocation5 + $0x34] sm:$0xf]
    %v68 = vld [vmem:[#allocation5 + $0x38] sm:$0xf]
    %v69 = vld [vmem:[#allocation5 + $0x3c] sm:$0xf]
    %v70 = vld [vmem:[#allocation5 + $0x40] sm:$0xf]
    %v71 = vld [vmem:[#allocation5 + $0x44] sm:$0xf]
    %v72 = vld [vmem:[#allocation5 + $0x48] sm:$0xf]
    %v73 = vld [vmem:[#allocation5 + $0x4c] sm:$0xf]
    %v74 = vld [vmem:[#allocation5 + $0x50] sm:$0xf]
    %v75 = vld [vmem:[#allocation5 + $0x54] sm:$0xf]
    %v76 = vld [vmem:[#allocation5 + $0x58] sm:$0xf]
    %v77 = vld [vmem:[#allocation5 + $0x5c] sm:$0xf]
    %v78 = vld [vmem:[#allocation5 + $0x60] sm:$0xf]
    %v79 = vld [vmem:[#allocation5 + $0x64] sm:$0xf]
    %v80 = vld [vmem:[#allocation5 + $0x68] sm:$0xf]
    %v81 = vld [vmem:[#allocation5 + $0x6c] sm:$0xf]
    %v82 = vld [vmem:[#allocation5 + $0x70] sm:$0xf]
    %v83 = vld [vmem:[#allocation5 + $0x74] sm:$0xf]
    %v84 = vld [vmem:[#allocation5 + $0x78] sm:$0xf]
    %v85 = vld [vmem:[#allocation5 + $0x7c] sm:$0xf]
    %v86 = vld [vmem:[%s2] sm:$0x1]
    %v88 = vperm.slane %v86, 0
    %v122 = vunpack.c.l.b16 %v54
    %v123 = vunpack.c.l.b16 %v55
    %v124 = vunpack.c.l.b16 %v56
    %v125 = vunpack.c.l.b16 %v57
    %v126 = vunpack.c.l.b16 %v58
    %v127 = vunpack.c.l.b16 %v59
    %v128 = vunpack.c.l.b16 %v60
    %v129 = vunpack.c.l.b16 %v61
    %v130 = vunpack.c.l.b16 %v62
    %v131 = vunpack.c.l.b16 %v63
    %v132 = vunpack.c.l.b16 %v64
    %v133 = vunpack.c.l.b16 %v65
    %v134 = vunpack.c.l.b16 %v66
    %v135 = vunpack.c.l.b16 %v67
    %v136 = vunpack.c.l.b16 %v68
    %v137 = vunpack.c.l.b16 %v69
    %v138 = vunpack.c.l.b16 %v70
    %v139 = vunpack.c.l.b16 %v71
    %v140 = vunpack.c.l.b16 %v72
    %v141 = vunpack.c.l.b16 %v73
    %v142 = vunpack.c.l.b16 %v74
    %v143 = vunpack.c.l.b16 %v75
    %v144 = vunpack.c.l.b16 %v76
    %v145 = vunpack.c.l.b16 %v77
    %v146 = vunpack.c.l.b16 %v78
    %v147 = vunpack.c.l.b16 %v79
    %v148 = vunpack.c.l.b16 %v80
    %v149 = vunpack.c.l.b16 %v81
    %v150 = vunpack.c.l.b16 %v82
    %v151 = vunpack.c.l.b16 %v83
    %v152 = vunpack.c.l.b16 %v84
    %v153 = vunpack.c.l.b16 %v85
    %v154 = vpack.c.b16 %v123, %v122
    %v155 = vpack.c.b16 %v125, %v124
    %v156 = vpack.c.b16 %v127, %v126
    %v157 = vpack.c.b16 %v129, %v128
    %v158 = vpack.c.b16 %v131, %v130
    %v159 = vpack.c.b16 %v133, %v132
    %v160 = vpack.c.b16 %v135, %v134
    %v161 = vpack.c.b16 %v137, %v136
    %v162 = vpack.c.b16 %v139, %v138
    %v163 = vpack.c.b16 %v141, %v140
    %v164 = vpack.c.b16 %v143, %v142
    %v165 = vpack.c.b16 %v145, %v144
    %v166 = vpack.c.b16 %v147, %v146
    %v167 = vpack.c.b16 %v149, %v148
    %v168 = vpack.c.b16 %v151, %v150
    %v169 = vpack.c.b16 %v153, %v152
    %186 = vmatpush.bf16.msra.mxu0 %v161
    %187 = vmatpush.bf16.msra.mxu0 %v160
    %188 = vmatpush.bf16.msra.mxu0 %v159
    %189 = vmatpush.bf16.msra.mxu0 %v158
    %190 = vmatpush.bf16.msra.mxu0 %v157
    %191 = vmatpush.bf16.msra.mxu0 %v156
    %192 = vmatpush.bf16.msra.mxu0 %v155
    %193 = vmatpush.bf16.msra.mxu0 %v154
    %194 = vmatmul.bf16.gmra.mxu0 %v52
    %v195 = vpop.f32.mrf.mxu0
    %v196 = vadd.f32 %v88, %v195
    %v197 = vpop.f32.mrf.mxu0
    %198 = vdwg.mxu0
    %199 = vmatpush.bf16.msra.mxu0 %v169
    %200 = vmatpush.bf16.msra.mxu0 %v168
    %201 = vmatpush.bf16.msra.mxu0 %v167
    %202 = vmatpush.bf16.msra.mxu0 %v166
    %203 = vmatpush.bf16.msra.mxu0 %v165
    %204 = vmatpush.bf16.msra.mxu0 %v164
    %205 = vmatpush.bf16.msra.mxu0 %v163
    %206 = vmatpush.bf16.msra.mxu0 %v162
    %207 = vmatmul.bf16.gmra.mxu0 %v53
    %v208 = vpop.f32.mrf.mxu0
    %v209 = vadd.f32 %v196, %v208
    %v210 = vpop.f32.mrf.mxu0
    %211 = vdwg.mxu0
    %212 = vst [vmem:[#allocation7] sm:$0x3] %v209
    // Predicated region
    $region22: #{tpu_custom_call.1} parent=1 // pred_check
      _
    $region23: #{tpu_custom_call.1} parent=1 // pred_check_branch
      %214 = sbr.rel (0) target = $region25
    $region24: #{tpu_custom_call.1} parent=1 // pred_region
      %216 = vsyncadd [#allocation4], 0
      %s218 = sshll.u32 [#allocation7], 4
      %s219 = int_to_ptr.vmem [resolvable:$true] %s218
      %s220 = sshll.u32 %s3, 4
      %s221 = int_to_ptr.hbm [resolvable:$true] %s220
      %223 = dma.vmem_to_hbm [thread:$0]  %s219, 32, %s221, [#allocation4]
    $region25: #{tpu_custom_call.1} parent=1 // pred_fallthru
      _
    // Predicated region
    $region26: #{tpu_custom_call.1} parent=1 // pred_check
      _
    $region27: #{tpu_custom_call.1} parent=1 // pred_check_branch
      %225 = sbr.rel (0) target = $region29
    $region28: #{tpu_custom_call.1} parent=1 // pred_region
      %227 = dma.done [#allocation4], 32
    $region29: #{tpu_custom_call.1} parent=1 // pred_fallthru
      _
    %228 = vsyncpa [#allocation3], 1
    %229 = vsyncpa [#allocation6], 1
    %230 = vsyncpa [#allocation4], 1

</llo_original>
